<compile_context>
chip_gen: v6e
topology: v6e:2x2x1
jax: 0.10.0
libtpu: 0.0.40
codegen_flags: <defaults>
</compile_context>

<pallas_src>
import functools

import jax
import jax.numpy as jnp
from jax import lax
from jax.experimental import pallas as pl
from jax.experimental.pallas import tpu as pltpu


def _variational_dropout_kernel(seed_ref, x_ref, o_ref, *, keep_prob, hidden, batch):
    TS, BH = x_ref.shape            # static block shape: (S-tile, batch*hidden)
    s_blk = pl.program_id(0)

    # Global coordinates of the (S, H) mask slice this tile covers.  The hash only
    # depends on (global row, hidden col, seed) so it is tiling-invariant and the
    # mask is shared across the batch axis, matching torch's x[:, :1] bernoulli.
    row = (lax.broadcasted_iota(jnp.int32, (TS, 1), 0) + s_blk * TS).astype(jnp.uint32)
    col = lax.broadcasted_iota(jnp.int32, (1, hidden), 1).astype(jnp.uint32)
    seed = seed_ref[0].astype(jnp.uint32)

    # Counter-based 32-bit hash (lowbias32-style, trimmed finalizer).  The per-row /
    # per-col multiplies run at (TS,1)/(1,H) shapes; only the combine + finalizer is
    # full (TS, H) VALU work.
    seedmix = seed * jnp.uint32(0xC2B2AE3D) + jnp.uint32(0x27D4EB2F)
    h = (row * jnp.uint32(0x9E3779B1)) ^ (col * jnp.uint32(0x85EBCA77)) ^ seedmix
    h = h ^ (h >> 16)
    h = h * jnp.uint32(0x7FEB352D)

    # Bernoulli(keep_prob): compare the top 23 bits (best mixed after the multiply)
    # against an integer threshold -- no int->float conversion needed.
    thresh = jnp.uint32(int(keep_prob * (1 << 23)))
    keep = (h >> 9) < thresh                              # (TS, H) bool, shared over B

    dtype = x_ref.dtype
    scale = jnp.asarray(1.0 / keep_prob, dtype)
    mask = jnp.where(keep, scale, jnp.zeros((), dtype))   # (TS, H) built in x.dtype

    # Replicate the (TS, H) mask along lanes for each batch element; the flattened
    # layout is (s, b*H + h), i.e. batch-major / hidden-minor, so simple repetition
    # of the H-wide mask matches exactly.
    if batch > 1:
        mask = jnp.concatenate([mask] * batch, axis=1)    # (TS, B*H)

    o_ref[...] = x_ref[...] * mask


def _chip_byte_targets():
    """Per-generation (block byte target, vmem_limit_bytes).

    Bigger blocks amortize the ~0.35us per-grid-step overhead, but the double-
    buffered input + output blocks (4x block bytes) must fit scoped VMEM:
      v7x: 64 MiB/TC physical, ~3.2 TB/s HBM  -> 6 MiB blocks, raise scoped limit.
      v6e: 32 MiB default scoped VMEM         -> 4 MiB blocks (4x = 16 MiB) fit.
      v5e: 16 MiB default scoped VMEM         -> stay at 2 MiB blocks.
    """
    kind = ""
    try:
        kind = jax.devices()[0].device_kind.lower()
    except Exception:
        pass
    if ("v7" in kind) or ("7x" in kind):
        return 6 << 20, 48 << 20
    if "v6" in kind:
        return 4 << 20, None
    return 2 << 20, None            # v5e and unknown chips: conservative default


def _choose_tile_s(S, row_bytes, sublane, target_bytes):
    """Largest S-tile under target_bytes, dtype-aware sublane rounding, and >= 2
    grid steps when possible (so v7x's two TensorCores both get work and the
    BlockSpec double-buffer pipeline has something to overlap)."""
    ts = max(1, min(S, target_bytes // max(1, row_bytes)))
    if S >= 2 * sublane:
        ts = min(ts, max(sublane, (S // 2) // sublane * sublane))
    if ts >= sublane:
        ts -= ts % sublane          # keep the sublane dim fully packed
    elif S > ts:
        ts = min(S, 8)              # 2nd-to-last block dim must be 8-divisible or == S
    return max(1, ts)


def variational_dropout(x, seed, dropout=0.5, training=True, donate_x=False):
    """Pallas implementation of the torchdeq variational Dropout forward.

    x: (S, B, H) = (qlen, batch, d_model), same axis order as the PyTorch module.
    The dropout mask has logical shape (S, 1, H) and is shared along the batch axis.
    `seed` must be varied per call (e.g. fold in layer/step ids) to decorrelate masks.
    """
    if (not training) or dropout == 0.0:
        return x
    if dropout >= 1.0:
        # p == 1 drops everything; avoid the 1/(1-p) division.
        return jnp.zeros_like(x)

    keep_prob = 1.0 - float(dropout)
    S, B, H = x.shape
    BH = B * H
    itemsize = jnp.dtype(x.dtype).itemsize
    sublane = 8 * max(1, 4 // itemsize)        # 8 rows f32, 16 bf16, 32 int8/fp8
    target_bytes, vmem_limit = _chip_byte_targets()
    ts = _choose_tile_s(S, BH * itemsize, sublane, target_bytes)
    grid = (pl.cdiv(S, ts),)

    # Lane-dense layout: flatten (S, B, H) -> (S, B*H).  Row-major, so the reshape is
    # free, and the kernel's output last dim is B*H lanes instead of H with B padding
    # the sublane axis.
    x_flat = x.reshape(S, BH)
    seed_arr = jnp.asarray([seed], dtype=jnp.int32)

    kernel = functools.partial(
        _variational_dropout_kernel, keep_prob=keep_prob, hidden=H, batch=B)

    cp_kwargs = dict(dimension_semantics=("parallel",))   # v7x: shard S-tiles over 2 TCs
    if vmem_limit is not None:
        cp_kwargs["vmem_limit_bytes"] = vmem_limit

    out_flat = pl.pallas_call(
        kernel,
        out_shape=jax.ShapeDtypeStruct((S, BH), x.dtype),
        grid_spec=pltpu.PrefetchScalarGridSpec(
            num_scalar_prefetch=1,
            grid=grid,
            in_specs=[pl.BlockSpec((ts, BH), lambda s, seed: (s, 0))],
            out_specs=pl.BlockSpec((ts, BH), lambda s, seed: (s, 0)),
        ),
        compiler_params=pltpu.CompilerParams(**cp_kwargs),
        # x_flat is call-arg index 1 (after the prefetched seed); alias it to the
        # output when the caller donates x (dropout is safely done in place).
        input_output_aliases=({1: 0} if donate_x else {}),
    )(seed_arr, x_flat)
    # TODO(synk): when this dropout sits next to a matmul/attention Pallas kernel,
    # fuse the mask-multiply into that kernel's epilogue to save a full HBM pass.
    return out_flat.reshape(S, B, H)


if __name__ == "__main__":
    key = jax.random.PRNGKey(0)
    S, B, H = 8, 2, 32              # (qlen, batch, d_model) — small test shapes
    x = jax.random.normal(key, (S, B, H), dtype=jnp.float32)

    dropout_p = 0.5
    out = variational_dropout(x, seed=1234, dropout=dropout_p, training=True)
    out = jax.block_until_ready(out)

    # Sanity checks on the semantics:
    assert out.shape == x.shape and out.dtype == x.dtype
    # Surviving elements are scaled by 1/(1-p); dropped elements are exactly 0.
    scaled = x / (1.0 - dropout_p)
    ok_vals = bool(jnp.all(jnp.isclose(out, 0.0) | jnp.isclose(out, scaled, atol=1e-5)))
    # Mask is shared along axis 1 (batch): drop pattern identical across batch.
    drop_pattern = jnp.isclose(out, 0.0) & ~jnp.isclose(x, 0.0)
    shared = bool(jnp.all(drop_pattern[:, :1, :] == drop_pattern))
    # Eval mode is identity; p == 0 is identity; p == 1 is all-zeros.
    eval_out = variational_dropout(x, seed=1234, dropout=dropout_p, training=False)
    identity_ok = bool(jnp.array_equal(eval_out, x))
    p0_ok = bool(jnp.array_equal(variational_dropout(x, seed=7, dropout=0.0), x))
    p1_ok = bool(jnp.all(variational_dropout(x, seed=7, dropout=1.0) == 0.0))

    if ok_vals and shared and identity_ok and p0_ok and p1_ok:
        print("KERNEL_OK")
    else:
        raise SystemExit("kernel output failed semantic checks")
</pallas_src>

<mosaic_0001>
module attributes {stable_mosaic.version = 11 : i64} {
  func.func @_variational_dropout_kernel(%arg0: i32, %arg1: memref<1xi32, #tpu.memory_space<smem>>, %arg2: memref<8x64xf32, #tpu.memory_space<vmem>>, %arg3: memref<8x64xf32, #tpu.memory_space<vmem>>) attributes {dimension_semantics = [#tpu.dimension_semantics<parallel>], iteration_bounds = array<i64: 1>, scalar_prefetch = 1 : i64, scratch_operands = 0 : i64, tpu.core_type = #tpu.core_type<tc>, window_params = [{transform_indices = @transform_0, window_bounds = array<i64: 8, 64>}, {transform_indices = @transform_1, window_bounds = array<i64: 8, 64>}]} {
    %0 = tpu.iota {dimensions = array<i32: 0>} : vector<8x1xi32>
    %c8_i32 = arith.constant 8 : i32
    %1 = arith.muli %arg0, %c8_i32 : i32
    %2 = vector.broadcast %1 : i32 to vector<8x1xi32>
    %3 = arith.addi %0, %2 : vector<8x1xi32>
    %4 = tpu.iota {dimensions = array<i32: 1>} : vector<1x32xi32>
    %c0 = arith.constant 0 : index
    %5 = memref.load %arg1[%c0] : memref<1xi32, #tpu.memory_space<smem>>
    %c-1028477379_i32 = arith.constant -1028477379 : i32
    %6 = arith.muli %5, %c-1028477379_i32 : i32
    %c668265263_i32 = arith.constant 668265263 : i32
    %7 = arith.addi %6, %c668265263_i32 : i32
    %c-1640531535_i32 = arith.constant -1640531535 : i32
    %8 = vector.broadcast %c-1640531535_i32 : i32 to vector<8x1xi32>
    %9 = arith.muli %3, %8 : vector<8x1xi32>
    %c-2048144777_i32 = arith.constant -2048144777 : i32
    %10 = vector.broadcast %c-2048144777_i32 : i32 to vector<1x32xi32>
    %11 = arith.muli %4, %10 : vector<1x32xi32>
    %12 = vector.broadcast %9 : vector<8x1xi32> to vector<8x32xi32>
    %13 = vector.broadcast %11 : vector<1x32xi32> to vector<8x32xi32>
    %14 = arith.xori %12, %13 : vector<8x32xi32>
    %15 = vector.broadcast %7 : i32 to vector<8x32xi32>
    %16 = arith.xori %14, %15 : vector<8x32xi32>
    %c16_i32 = arith.constant 16 : i32
    %17 = vector.broadcast %c16_i32 : i32 to vector<8x32xi32>
    %18 = arith.shrui %16, %17 : vector<8x32xi32>
    %19 = arith.xori %16, %18 : vector<8x32xi32>
    %c2146121005_i32 = arith.constant 2146121005 : i32
    %20 = vector.broadcast %c2146121005_i32 : i32 to vector<8x32xi32>
    %21 = arith.muli %19, %20 : vector<8x32xi32>
    %c9_i32 = arith.constant 9 : i32
    %22 = vector.broadcast %c9_i32 : i32 to vector<8x32xi32>
    %23 = arith.shrui %21, %22 : vector<8x32xi32>
    %c4194304_i32 = arith.constant 4194304 : i32
    %24 = vector.broadcast %c4194304_i32 : i32 to vector<8x32xi32>
    %25 = arith.cmpi ult, %23, %24 : vector<8x32xi32>
    %cst = arith.constant 2.000000e+00 : f32
    %cst_0 = arith.constant 0.000000e+00 : f32
    %26 = vector.broadcast %cst : f32 to vector<8x32xf32>
    %27 = vector.broadcast %cst_0 : f32 to vector<8x32xf32>
    %28 = arith.select %25, %26, %27 : vector<8x32xi1>, vector<8x32xf32>
    %29 = tpu.concatenate %28, %28 in 1 : vector<8x32xf32>, vector<8x32xf32> -> vector<8x64xf32>
    %c0_1 = arith.constant 0 : index
    %c0_2 = arith.constant 0 : index
    %30 = vector.load %arg2[%c0_1, %c0_2] : memref<8x64xf32, #tpu.memory_space<vmem>>, vector<8x64xf32>
    %31 = arith.mulf %30, %29 : vector<8x64xf32>
    %c0_3 = arith.constant 0 : index
    %c0_4 = arith.constant 0 : index
    %32 = vector.load %arg3[%c0_3, %c0_4] : memref<8x64xf32, #tpu.memory_space<vmem>>, vector<8x64xf32>
    tpu.vector_store %arg3[%c0_3, %c0_4], %31 {strides = array<i32>} : memref<8x64xf32, #tpu.memory_space<vmem>>, vector<8x64xf32>,
    return
  }
  func.func @transform_0(%arg0: i32, %arg1: memref<1xi32, #tpu.memory_space<smem>>) -> (i32, i32) {
    %c0_i32 = arith.constant 0 : i32
    %c0_i32_0 = arith.constant 0 : i32
    return %arg0, %c0_i32 : i32, i32
  }
  func.func @transform_1(%arg0: i32, %arg1: memref<1xi32, #tpu.memory_space<smem>>) -> (i32, i32) {
    %c0_i32 = arith.constant 0 : i32
    %c0_i32_0 = arith.constant 0 : i32
    return %arg0, %c0_i32 : i32, i32
  }
}

</mosaic_0001>

<llo_original>
// kernel: tpu_custom_call.1
$region0: #{tpu_custom_call.1}
  #allocation0 [shape = 'u32[]', space=smem, size = 0x4, offset = 0x4, fixed_abs, tag = 'smem constant byte address 0x4 - core index']
  #allocation1 [shape = 'u32[144,128]{1,0:T(1,128)}', space=vmem, size = 0x12000, scoped, tag = 'internal scratch']
  #allocation2 [shape = 's32[1]{0}', space=sflag, size = 0x4, scoped, tag = 'scoped memory for tpu_custom_call.1']
  #allocation3 [shape = 's32[1]{0:T(128)S(6)}', space=smem, size = 0x200, scoped, tag = 'prefetched SMEM operand 0']
  %s0 = inlined_call_operand.<no memory space> [shape: s32[1], index: 0, kind: input, shape index: {}]
  %s1 = inlined_call_operand.hbm [shape: f32[8,64], index: 1, kind: input, shape index: {}]
  %s2 = inlined_call_operand.hbm [shape: f32[8,64], index: 2, kind: output, shape index: {}]
  %s3 = sld [smem:[#allocation0]]
  $region18: #{tpu_custom_call.1} parent=0
    _
  %s5 = ssub.s32 1, %s3
  %s6 = scalar_select 0, %s5, %s3
  %7 = sst [smem:[#allocation3]] %s0
  $region1: #{tpu_custom_call.1} parent=0
    #allocation4 [shape = 'u8[4096]{0}', space=vmem, size = 0x1000, scoped, tag = 'input window, operand 1, single buffered']
    #allocation5 [shape = 's32[1]{0}', space=sflag, size = 0x4, scoped, tag = 'scoped memory for tpu_custom_call.1']
    #allocation6 [shape = 's32[1]{0}', space=sflag, size = 0x4, scoped, tag = 'scoped memory for tpu_custom_call.1']
    #allocation7 [shape = 'u8[4096]{0}', space=vmem, size = 0x1000, scoped, tag = 'output window, operand 0, single buffered']
    %8 = vsyncpa [#allocation5], 0
    %9 = vsyncpa [#allocation6], 0
    // Predicated region
    $region2: #{tpu_custom_call.1} parent=1 // pred_check
      _
    $region3: #{tpu_custom_call.1} parent=1 // pred_check_branch
      %11 = sbr.rel (0) target = $region5
    $region4: #{tpu_custom_call.1} parent=1 // pred_region
      %s13 = ssub.s32 128, 128
      %14 = vsyncadd [#allocation5], %s13
      %s16 = sshll.u32 [#allocation4], 4
      %s17 = int_to_ptr.vmem [resolvable:$true] %s16
      %19 = dma.hbm_to_vmem [thread:$0]  %s1, 128, %s17, [#allocation5]
    $region5: #{tpu_custom_call.1} parent=1 // pred_fallthru
      _
    // Predicated region
    $region6: #{tpu_custom_call.1} parent=1 // pred_check
      _
    $region7: #{tpu_custom_call.1} parent=1 // pred_check_branch
      %21 = sbr.rel (0) target = $region9
    $region8: #{tpu_custom_call.1} parent=1 // pred_region
      %22 = dma.done [#allocation5], 128
    $region9: #{tpu_custom_call.1} parent=1 // pred_fallthru
      _
    %v23 = vlaneseq
    %v24 = vshrl.u32 %v23, 7
    %s25 = smul.u32 0, 8
    %v26 = vstv %s25
    %v27 = vadd.s32 %v24, %v26
    %v28 = vlaneseq
    %v29 = vand.u32 %v28, 127
    %s30 = sld [smem:[#allocation3]]
    %s31 = smul.u32 %s30, 3266489917
    %s32 = sadd.s32 %s31, 668265263
    %v33 = vmul.u32 %v27, 2654435761
    %v34 = vmul.u32 %v29, 2246822519
    %v35 = vxor.u32 %v33, %v34
    %v36 = vstv %s32
    %v37 = vxor.u32 %v35, %v36
    %v38 = vshrl.u32 %v37, 16
    %v39 = vxor.u32 %v37, %v38
    %v40 = vmul.u32 %v39, 2146121005
    %v41 = vshrl.u32 %v40, 9
    %vm42 = vcmp.lt.u32.totalorder %v41, 4194304
    %v43 = vsel %vm42, 2.0, 0.0
    %45 = vrot.lane.b32.xlu0 %v43, 32
    %v46 = vpop.permute.xlu0 %45
    %vm48 = vcmask 261120
    %v49 = vsel %vm48, %v43, %v46
    %v50 = vld [vmem:[#allocation4] sm:$0xff]
    %v51 = vmul.f32 %v50, %v49
    %vm52 = vcmask 523264
    %53 = vst.msk [vmem:[#allocation7] sm:$0xff] %vm52, %v51
    // Predicated region
    $region10: #{tpu_custom_call.1} parent=1 // pred_check
      _
    $region11: #{tpu_custom_call.1} parent=1 // pred_check_branch
      %55 = sbr.rel (0) target = $region13
    $region12: #{tpu_custom_call.1} parent=1 // pred_region
      %s57 = ssub.s32 128, 128
      %58 = vsyncadd [#allocation6], %s57
      %s60 = sshll.u32 [#allocation7], 4
      %s61 = int_to_ptr.vmem [resolvable:$true] %s60
      %63 = dma.vmem_to_hbm [thread:$0]  %s61, 128, %s2, [#allocation6]
    $region13: #{tpu_custom_call.1} parent=1 // pred_fallthru
      _
    // Predicated region
    $region14: #{tpu_custom_call.1} parent=1 // pred_check
      _
    $region15: #{tpu_custom_call.1} parent=1 // pred_check_branch
      %65 = sbr.rel (0) target = $region17
    $region16: #{tpu_custom_call.1} parent=1 // pred_region
      %66 = dma.done [#allocation6], 128
    $region17: #{tpu_custom_call.1} parent=1 // pred_fallthru
      _
    %67 = vsyncpa [#allocation5], 1
    %68 = vsyncpa [#allocation6], 1

</llo_original>
